<compile_context>
chip_gen: v6e
topology: v6e:2x2x1
jax: 0.10.0
libtpu: 0.0.40
codegen_flags: <defaults>
</compile_context>

<pallas_src>
import jax
import jax.numpy as jnp
from jax import lax
from jax.experimental import pallas as pl
from jax.experimental.pallas import tpu as pltpu


# ----------------------------------------------------------------------------
# Pallas kernel: full bidirectional LSTM recurrence in one invocation.
# ----------------------------------------------------------------------------
def _bilstm_kernel(x_ref, w_ref, b_ref, out_ref, h_fin_ref, c_fin_ref):
    """Fused bidirectional LSTM over the whole sequence.

    x_ref:     (T, Bp, E)    bf16  embedded tokens, time-major, batch padded
    w_ref:     (2(E+H), 8H)  bf16  block-diagonal packed weights,
                                   gate order i|f|o|g, fwd/bwd interleaved/gate
    b_ref:     (1, 8H)       f32   packed biases (bih+bhh), same column order
    out_ref:   (T, 2, Bp, H) f32   dir 0 = forward@t, dir 1 = backward@t
    h_fin_ref: (Bp, 2H)      f32   final hidden, [:, :H]=fwd, [:, H:]=bwd
    c_fin_ref: (Bp, 2H)      f32   final cell,   [:, :H]=fwd, [:, H:]=bwd
    """
    T, Bp, _ = x_ref.shape
    H2 = h_fin_ref.shape[-1]          # 2H
    H = H2 // 2

    # Resident weights/bias: load once, reuse every step.
    w = w_ref[...]
    b = b_ref[...]

    def step(t, carry):
        h, c = carry                  # (Bp, 2H) f32; [:, :H]=fwd, [:, H:]=bwd
        rt = T - 1 - t
        x_f = x_ref[t]                # (Bp, E) bf16
        x_b = x_ref[rt]               # (Bp, E) bf16
        h16 = h.astype(x_f.dtype)
        # rows of w: [x_fwd | h_fwd | x_bwd | h_bwd]
        inp = jnp.concatenate([x_f, h16[:, :H], x_b, h16[:, H:]], axis=-1)
        gates = jnp.dot(inp, w, preferred_element_type=jnp.float32) + b
        sg = jax.nn.sigmoid(gates[:, :3 * H2])     # [i | f | o], each 2H wide
        gg = jnp.tanh(gates[:, 3 * H2:])           # [g], 2H wide
        c_new = sg[:, H2:2 * H2] * c + sg[:, :H2] * gg
        h_new = sg[:, 2 * H2:] * jnp.tanh(c_new)
        out_ref[t, 0] = h_new[:, :H]               # forward output at time t
        out_ref[rt, 1] = h_new[:, H:]              # backward output at time rt
        return h_new, c_new

    zeros = jnp.zeros((Bp, H2), jnp.float32)
    h_fin, c_fin = lax.fori_loop(0, T, step, (zeros, zeros))
    h_fin_ref[...] = h_fin
    c_fin_ref[...] = c_fin


# ----------------------------------------------------------------------------
# Weight packing: PyTorch (4H,E)/(4H,H) i,f,g,o -> block-diag (2(E+H), 8H)
# with gate-column order i|f|o|g and fwd/bwd interleaved inside each gate.
# ----------------------------------------------------------------------------
def _pack_lstm_weights(params):
    wih_f, whh_f = params["wih_f"], params["whh_f"]    # (4H, E), (4H, H)
    wih_b, whh_b = params["wih_b"], params["whh_b"]
    H = whh_f.shape[1]
    E = wih_f.shape[1]

    def gate_cols(wih, whh):
        wcat = jnp.concatenate([wih, whh], axis=1).T   # (E+H, 4H), cols i,f,g,o
        return (wcat[:, 0:H], wcat[:, H:2 * H],
                wcat[:, 2 * H:3 * H], wcat[:, 3 * H:4 * H])

    i_f, f_f, g_f, o_f = gate_cols(wih_f, whh_f)
    i_b, f_b, g_b, o_b = gate_cols(wih_b, whh_b)
    z = jnp.zeros((E + H, H), jnp.float32)

    def blk(a_fwd, a_bwd):                             # (2(E+H), 2H) block-diag
        return jnp.concatenate(
            [jnp.concatenate([a_fwd, z], axis=1),
             jnp.concatenate([z, a_bwd], axis=1)], axis=0)

    # sigmoid gates (i, f, o) contiguous, tanh gate (g) last
    w_big = jnp.concatenate(
        [blk(i_f, i_b), blk(f_f, f_b), blk(o_f, o_b), blk(g_f, g_b)], axis=1)

    bf = params["bih_f"] + params["bhh_f"]             # (4H,), order i,f,g,o
    bb = params["bih_b"] + params["bhh_b"]

    def gs(v):
        return v[0:H], v[H:2 * H], v[2 * H:3 * H], v[3 * H:4 * H]

    bi_f, bf_f, bg_f, bo_f = gs(bf)
    bi_b, bf_b, bg_b, bo_b = gs(bb)
    b_big = jnp.concatenate(
        [bi_f, bi_b, bf_f, bf_b, bo_f, bo_b, bg_f, bg_b]).reshape(1, 8 * H)
    return w_big.astype(jnp.bfloat16), b_big.astype(jnp.float32)


def bidirectional_lstm(x_tbe, w_big, b_big, hidden_size):
    """x_tbe: (T, Bp, E) bf16. Returns (out (T,2,Bp,H), h_fin (Bp,2H), c_fin (Bp,2H))."""
    T, Bp, E = x_tbe.shape
    H = hidden_size

    out_shapes = (
        jax.ShapeDtypeStruct((T, 2, Bp, H), jnp.float32),   # per-step hidden
        jax.ShapeDtypeStruct((Bp, 2 * H), jnp.float32),     # final h
        jax.ShapeDtypeStruct((Bp, 2 * H), jnp.float32),     # final c
    )
    grid_spec = pltpu.PrefetchScalarGridSpec(
        num_scalar_prefetch=0,
        grid=(1,),                                          # whole slab in VMEM
        in_specs=[
            pl.BlockSpec((T, Bp, E), lambda i: (0, 0, 0)),
            pl.BlockSpec(w_big.shape, lambda i: (0, 0)),
            pl.BlockSpec(b_big.shape, lambda i: (0, 0)),
        ],
        out_specs=[
            pl.BlockSpec((T, 2, Bp, H), lambda i: (0, 0, 0, 0)),
            pl.BlockSpec((Bp, 2 * H), lambda i: (0, 0)),
            pl.BlockSpec((Bp, 2 * H), lambda i: (0, 0)),
        ],
    )
    return pl.pallas_call(
        _bilstm_kernel,
        out_shape=out_shapes,
        grid_spec=grid_spec,
        compiler_params=pltpu.CompilerParams(
            dimension_semantics=("arbitrary",)),
    )(x_tbe, w_big, b_big)


# ----------------------------------------------------------------------------
# Encoder forward = embedding lookup (wrapper) + fused Pallas biLSTM.
# Inter-layer dropout is a no-op for num_layers=1, matching PyTorch.
# ----------------------------------------------------------------------------
def encoder_forward(tokens, params):
    """tokens: (B, T) int32 -> (output (B,T,2H), hidden (1,B,2H), cell (1,B,2H))."""
    B, T = tokens.shape
    H = params["whh_f"].shape[1]                             # whh is (4H, H)

    # TODO(synk): fuse the embedding gather (scalar-prefetched token ids + row
    # gather DMA) into the kernel; kept in the wrapper for robustness.
    emb = jnp.take(params["embedding"], tokens, axis=0)      # (B, T, E)
    x_tbe = jnp.transpose(emb, (1, 0, 2))                    # (T, B, E)

    Bp = ((B + 7) // 8) * 8                                  # pad batch to 8 sublanes
    x_tbe = jnp.pad(x_tbe, ((0, 0), (0, Bp - B), (0, 0)))
    x_tbe = x_tbe.astype(jnp.bfloat16)

    w_big, b_big = _pack_lstm_weights(params)
    out, h_fin, c_fin = bidirectional_lstm(x_tbe, w_big, b_big, H)

    # (T, 2, Bp, H) -> (B, T, 2H): one transpose + contiguous reshape.
    output = jnp.transpose(out, (2, 0, 1, 3)).reshape(Bp, T, 2 * H)[:B]
    hidden = h_fin[:B][None]                                  # (1, B, 2H)
    cell = c_fin[:B][None]                                    # (1, B, 2H)
    return output, hidden, cell


encoder_forward_jit = jax.jit(encoder_forward)


# ----------------------------------------------------------------------------
# Pure-JAX f32 reference (lax.scan) with exact PyTorch semantics.
# ----------------------------------------------------------------------------
def _lstm_ref_dir(x_tbe, wih, whh, bih, bhh):
    B = x_tbe.shape[1]
    H = whh.shape[1]

    def step(carry, x_t):
        h, c = carry
        gates = x_t @ wih.T + h @ whh.T + bih + bhh
        i, f, g, o = jnp.split(gates, 4, axis=-1)
        c = jax.nn.sigmoid(f) * c + jax.nn.sigmoid(i) * jnp.tanh(g)
        h = jax.nn.sigmoid(o) * jnp.tanh(c)
        return (h, c), h

    init = (jnp.zeros((B, H), jnp.float32), jnp.zeros((B, H), jnp.float32))
    (h, c), ys = lax.scan(step, init, x_tbe)
    return ys, h, c


def encoder_ref(tokens, params):
    emb = jnp.take(params["embedding"], tokens, axis=0)
    x = jnp.transpose(emb, (1, 0, 2)).astype(jnp.float32)
    yf, hf, cf = _lstm_ref_dir(x, params["wih_f"], params["whh_f"],
                               params["bih_f"], params["bhh_f"])
    yb, hb, cb = _lstm_ref_dir(x[::-1], params["wih_b"], params["whh_b"],
                               params["bih_b"], params["bhh_b"])
    yb = yb[::-1]
    output = jnp.concatenate(
        [jnp.transpose(yf, (1, 0, 2)), jnp.transpose(yb, (1, 0, 2))], axis=-1)
    hidden = jnp.concatenate([hf, hb], axis=-1)[None]
    cell = jnp.concatenate([cf, cb], axis=-1)[None]
    return output, hidden, cell


# ----------------------------------------------------------------------------
def make_params(key, src_vocab, embedding_size, hidden_size):
    keys = jax.random.split(key, 9)
    H, E = hidden_size, embedding_size
    s = 1.0 / jnp.sqrt(jnp.float32(H))
    u = lambda k, shape: jax.random.uniform(k, shape, jnp.float32, -s, s)
    return {
        "embedding": jax.random.normal(keys[0], (src_vocab, E), jnp.float32),
        "wih_f": u(keys[1], (4 * H, E)),
        "whh_f": u(keys[2], (4 * H, H)),
        "bih_f": u(keys[3], (4 * H,)),
        "bhh_f": u(keys[4], (4 * H,)),
        "wih_b": u(keys[5], (4 * H, E)),
        "whh_b": u(keys[6], (4 * H, H)),
        "bih_b": u(keys[7], (4 * H,)),
        "bhh_b": u(keys[8], (4 * H,)),
    }


if __name__ == "__main__":
    SRC_VOCAB = 50
    EMB = 32
    HID = 32
    B, T = 2, 8

    key = jax.random.PRNGKey(0)
    kp, kt = jax.random.split(key)
    params = make_params(kp, SRC_VOCAB, EMB, HID)
    tokens = jax.random.randint(kt, (B, T), 0, SRC_VOCAB, dtype=jnp.int32)

    out, hidden, cell = jax.block_until_ready(encoder_forward_jit(tokens, params))
    ref_out, ref_hidden, ref_cell = encoder_ref(tokens, params)

    assert out.shape == (B, T, 2 * HID)
    assert hidden.shape == (1, B, 2 * HID)
    assert cell.shape == (1, B, 2 * HID)
    # bf16 MXU operands in the kernel vs a pure-f32 reference -> loosened
    # tolerances (h bounded by tanh; cell is unbounded, give it more slack).
    assert float(jnp.max(jnp.abs(out - ref_out))) < 6e-2
    assert float(jnp.max(jnp.abs(hidden - ref_hidden))) < 6e-2
    assert float(jnp.max(jnp.abs(cell - ref_cell))) < 1e-1

    print("KERNEL_OK")
</pallas_src>

<mosaic_0001>
module attributes {stable_mosaic.version = 11 : i64} {
  func.func @_bilstm_kernel(%arg0: i32, %arg1: memref<8x8x32xbf16, #tpu.memory_space<vmem>>, %arg2: memref<128x256xbf16, #tpu.memory_space<vmem>>, %arg3: memref<1x256xf32, #tpu.memory_space<vmem>>, %arg4: memref<8x2x8x32xf32, #tpu.memory_space<vmem>>, %arg5: memref<8x64xf32, #tpu.memory_space<vmem>>, %arg6: memref<8x64xf32, #tpu.memory_space<vmem>>) attributes {dimension_semantics = [#tpu.dimension_semantics<arbitrary>], iteration_bounds = array<i64: 1>, scalar_prefetch = 0 : i64, scratch_operands = 0 : i64, tpu.core_type = #tpu.core_type<tc>, window_params = [{pipeline_mode = #tpu.pipeline_mode<synchronous>, transform_indices = @transform_0, window_bounds = array<i64: 8, 8, 32>}, {pipeline_mode = #tpu.pipeline_mode<synchronous>, transform_indices = @transform_1, window_bounds = array<i64: 128, 256>}, {pipeline_mode = #tpu.pipeline_mode<synchronous>, transform_indices = @transform_2, window_bounds = array<i64: 1, 256>}, {pipeline_mode = #tpu.pipeline_mode<synchronous>, transform_indices = @transform_3, window_bounds = array<i64: 8, 2, 8, 32>}, {pipeline_mode = #tpu.pipeline_mode<synchronous>, transform_indices = @transform_4, window_bounds = array<i64: 8, 64>}, {pipeline_mode = #tpu.pipeline_mode<synchronous>, transform_indices = @transform_5, window_bounds = array<i64: 8, 64>}]} {
    %c0 = arith.constant 0 : index
    %c0_0 = arith.constant 0 : index
    %0 = vector.load %arg2[%c0, %c0_0] : memref<128x256xbf16, #tpu.memory_space<vmem>>, vector<128x256xbf16>
    %c0_1 = arith.constant 0 : index
    %c0_2 = arith.constant 0 : index
    %1 = vector.load %arg3[%c0_1, %c0_2] : memref<1x256xf32, #tpu.memory_space<vmem>>, vector<1x256xf32>
    %cst = arith.constant 0.000000e+00 : f32
    %2 = vector.broadcast %cst : f32 to vector<8x64xf32>
    %c0_i32 = arith.constant 0 : i32
    %c8_i32 = arith.constant 8 : i32
    %3 = arith.addi %c0_i32, %c8_i32 : i32
    %c1_i32 = arith.constant 1 : i32
    %4:2 = scf.for %arg7 = %c0_i32 to %3 step %c1_i32 iter_args(%arg8 = %2, %arg9 = %2) -> (vector<8x64xf32>, vector<8x64xf32>)  : i32 {
      %c7_i32 = arith.constant 7 : i32
      %7 = arith.subi %c7_i32, %arg7 : i32
      %8 = arith.index_cast %arg7 : i32 to index
      %c0_8 = arith.constant 0 : index
      %c0_9 = arith.constant 0 : index
      %9 = vector.load %arg1[%8, %c0_8, %c0_9] : memref<8x8x32xbf16, #tpu.memory_space<vmem>>, vector<1x8x32xbf16>
      %10 = vector.shape_cast %9 : vector<1x8x32xbf16> to vector<8x32xbf16>
      %11 = arith.index_cast %7 : i32 to index
      %c0_10 = arith.constant 0 : index
      %c0_11 = arith.constant 0 : index
      %12 = vector.load %arg1[%11, %c0_10, %c0_11] : memref<8x8x32xbf16, #tpu.memory_space<vmem>>, vector<1x8x32xbf16>
      %13 = vector.shape_cast %12 : vector<1x8x32xbf16> to vector<8x32xbf16>
      %14 = arith.truncf %arg8 : vector<8x64xf32> to vector<8x64xbf16>
      %15 = vector.extract_strided_slice %14 {offsets = [0, 0], sizes = [8, 32], strides = [1, 1]} : vector<8x64xbf16> to vector<8x32xbf16>
      %16 = vector.extract_strided_slice %14 {offsets = [0, 32], sizes = [8, 32], strides = [1, 1]} : vector<8x64xbf16> to vector<8x32xbf16>
      %17 = tpu.concatenate %10, %15, %13, %16 in 1 : vector<8x32xbf16>, vector<8x32xbf16>, vector<8x32xbf16>, vector<8x32xbf16> -> vector<8x128xbf16>
      %cst_12 = arith.constant dense<0.000000e+00> : vector<8x256xf32>
      %18 = tpu.matmul %17, %0, %cst_12 {dimension_numbers = #tpu.dot_dimension_numbers<[1], [0], [0], [1], [0, 0, 1, 1], [], []>} : vector<8x128xbf16>, vector<128x256xbf16>, vector<8x256xf32> -> vector<8x256xf32>
      %19 = vector.broadcast %1 : vector<1x256xf32> to vector<8x256xf32>
      %20 = arith.addf %18, %19 : vector<8x256xf32>
      %21 = vector.extract_strided_slice %20 {offsets = [0, 0], sizes = [8, 192], strides = [1, 1]} : vector<8x256xf32> to vector<8x192xf32>
      %22 = arith.negf %21 : vector<8x192xf32>
      %23 = math.exp %22 : vector<8x192xf32>
      %cst_13 = arith.constant 1.000000e+00 : f32
      %24 = vector.broadcast %cst_13 : f32 to vector<8x192xf32>
      %25 = arith.addf %24, %23 : vector<8x192xf32>
      %26 = arith.divf %24, %25 : vector<8x192xf32>
      %27 = vector.extract_strided_slice %20 {offsets = [0, 192], sizes = [8, 64], strides = [1, 1]} : vector<8x256xf32> to vector<8x64xf32>
      %28 = math.tanh %27 : vector<8x64xf32>
      %29 = vector.extract_strided_slice %26 {offsets = [0, 64], sizes = [8, 64], strides = [1, 1]} : vector<8x192xf32> to vector<8x64xf32>
      %30 = arith.mulf %29, %arg9 : vector<8x64xf32>
      %31 = vector.extract_strided_slice %26 {offsets = [0, 0], sizes = [8, 64], strides = [1, 1]} : vector<8x192xf32> to vector<8x64xf32>
      %32 = arith.mulf %31, %28 : vector<8x64xf32>
      %33 = arith.addf %30, %32 : vector<8x64xf32>
      %34 = vector.extract_strided_slice %26 {offsets = [0, 128], sizes = [8, 64], strides = [1, 1]} : vector<8x192xf32> to vector<8x64xf32>
      %35 = math.tanh %33 : vector<8x64xf32>
      %36 = arith.mulf %34, %35 : vector<8x64xf32>
      %37 = vector.extract_strided_slice %36 {offsets = [0, 0], sizes = [8, 32], strides = [1, 1]} : vector<8x64xf32> to vector<8x32xf32>
      %38 = arith.index_cast %arg7 : i32 to index
      %c0_14 = arith.constant 0 : index
      %c0_15 = arith.constant 0 : index
      %c0_16 = arith.constant 0 : index
      %39 = vector.load %arg4[%38, %c0_14, %c0_15, %c0_16] : memref<8x2x8x32xf32, #tpu.memory_space<vmem>>, vector<1x1x8x32xf32>
      %40 = vector.shape_cast %39 : vector<1x1x8x32xf32> to vector<8x32xf32>
      %41 = vector.shape_cast %37 : vector<8x32xf32> to vector<1x1x8x32xf32>
      tpu.vector_store %arg4[%38, %c0_14, %c0_15, %c0_16], %41 {strides = array<i32>} : memref<8x2x8x32xf32, #tpu.memory_space<vmem>>, vector<1x1x8x32xf32>,
      %42 = vector.extract_strided_slice %36 {offsets = [0, 32], sizes = [8, 32], strides = [1, 1]} : vector<8x64xf32> to vector<8x32xf32>
      %43 = arith.index_cast %7 : i32 to index
      %c1 = arith.constant 1 : index
      %c0_17 = arith.constant 0 : index
      %c0_18 = arith.constant 0 : index
      %44 = vector.load %arg4[%43, %c1, %c0_17, %c0_18] : memref<8x2x8x32xf32, #tpu.memory_space<vmem>>, vector<1x1x8x32xf32>
      %45 = vector.shape_cast %44 : vector<1x1x8x32xf32> to vector<8x32xf32>
      %46 = vector.shape_cast %42 : vector<8x32xf32> to vector<1x1x8x32xf32>
      tpu.vector_store %arg4[%43, %c1, %c0_17, %c0_18], %46 {strides = array<i32>} : memref<8x2x8x32xf32, #tpu.memory_space<vmem>>, vector<1x1x8x32xf32>,
      scf.yield %36, %33 : vector<8x64xf32>, vector<8x64xf32>
    }
    %c8_i32_3 = arith.constant 8 : i32
    %c0_4 = arith.constant 0 : index
    %c0_5 = arith.constant 0 : index
    %5 = vector.load %arg5[%c0_4, %c0_5] : memref<8x64xf32, #tpu.memory_space<vmem>>, vector<8x64xf32>
    tpu.vector_store %arg5[%c0_4, %c0_5], %4#0 {strides = array<i32>} : memref<8x64xf32, #tpu.memory_space<vmem>>, vector<8x64xf32>,
    %c0_6 = arith.constant 0 : index
    %c0_7 = arith.constant 0 : index
    %6 = vector.load %arg6[%c0_6, %c0_7] : memref<8x64xf32, #tpu.memory_space<vmem>>, vector<8x64xf32>
    tpu.vector_store %arg6[%c0_6, %c0_7], %4#1 {strides = array<i32>} : memref<8x64xf32, #tpu.memory_space<vmem>>, vector<8x64xf32>,
    return
  }
  func.func @transform_0(%arg0: i32) -> (i32, i32, i32) {
    %c0_i32 = arith.constant 0 : i32
    %c0_i32_0 = arith.constant 0 : i32
    %c0_i32_1 = arith.constant 0 : i32
    %c0_i32_2 = arith.constant 0 : i32
    return %c0_i32, %c0_i32_0, %c0_i32_1 : i32, i32, i32
  }
  func.func @transform_1(%arg0: i32) -> (i32, i32) {
    %c0_i32 = arith.constant 0 : i32
    %c0_i32_0 = arith.constant 0 : i32
    %c0_i32_1 = arith.constant 0 : i32
    return %c0_i32, %c0_i32_0 : i32, i32
  }
  func.func @transform_2(%arg0: i32) -> (i32, i32) {
    %c0_i32 = arith.constant 0 : i32
    %c0_i32_0 = arith.constant 0 : i32
    %c0_i32_1 = arith.constant 0 : i32
    return %c0_i32, %c0_i32_0 : i32, i32
  }
  func.func @transform_3(%arg0: i32) -> (i32, i32, i32, i32) {
    %c0_i32 = arith.constant 0 : i32
    %c0_i32_0 = arith.constant 0 : i32
    %c0_i32_1 = arith.constant 0 : i32
    %c0_i32_2 = arith.constant 0 : i32
    %c0_i32_3 = arith.constant 0 : i32
    return %c0_i32, %c0_i32_0, %c0_i32_1, %c0_i32_2 : i32, i32, i32, i32
  }
  func.func @transform_4(%arg0: i32) -> (i32, i32) {
    %c0_i32 = arith.constant 0 : i32
    %c0_i32_0 = arith.constant 0 : i32
    %c0_i32_1 = arith.constant 0 : i32
    return %c0_i32, %c0_i32_0 : i32, i32
  }
  func.func @transform_5(%arg0: i32) -> (i32, i32) {
    %c0_i32 = arith.constant 0 : i32
    %c0_i32_0 = arith.constant 0 : i32
    %c0_i32_1 = arith.constant 0 : i32
    return %c0_i32, %c0_i32_0 : i32, i32
  }
}

</mosaic_0001>

<llo_original>
// kernel: encoder_forward.1
$region0: #{encoder_forward.1}
  #allocation0 [shape = 'u32[]', space=smem, size = 0x4, offset = 0x4, fixed_abs, tag = 'smem constant byte address 0x4 - core index']
  #allocation1 [shape = 'u32[144,128]{1,0:T(1,128)}', space=vmem, size = 0x12000, scoped, tag = 'internal scratch']
  %s0 = inlined_call_operand.vmem [shape: bf16[8,8,32], index: 0, kind: input, shape index: {}]
  %s1 = inlined_call_operand.vmem [shape: bf16[128,256], index: 1, kind: input, shape index: {}]
  %s2 = inlined_call_operand.vmem [shape: f32[1,256], index: 2, kind: input, shape index: {}]
  %s3 = inlined_call_operand.vmem [shape: f32[8,2,8,32], index: 3, kind: output, shape index: {0}]
  %s4 = inlined_call_operand.vmem [shape: f32[8,64], index: 4, kind: output, shape index: {1}]
  %s5 = inlined_call_operand.vmem [shape: f32[8,64], index: 5, kind: output, shape index: {2}]
  %6 = xla_tuple %s3, %s4, %s5
  %s7 = sld [smem:[#allocation0]]
  $region45: #{encoder_forward.1} parent=0
    _
  %s9 = ssub.s32 1, %s7
  %s10 = scalar_select 0, %s9, %s7
  // Predicated region
  $region2: #{encoder_forward.1} parent=0 // pred_check
    _
  $region3: #{encoder_forward.1} parent=0 // pred_check_branch
    %12 = sbr.rel (0) target = $region5
  $region4: #{encoder_forward.1} parent=0 // pred_region
    _
  $region5: #{encoder_forward.1} parent=0 // pred_fallthru
    _
  // Predicated region
  $region6: #{encoder_forward.1} parent=0 // pred_check
    _
  $region7: #{encoder_forward.1} parent=0 // pred_check_branch
    %14 = sbr.rel (0) target = $region9
  $region8: #{encoder_forward.1} parent=0 // pred_region
    _
  $region9: #{encoder_forward.1} parent=0 // pred_fallthru
    _
  // Predicated region
  $region10: #{encoder_forward.1} parent=0 // pred_check
    _
  $region11: #{encoder_forward.1} parent=0 // pred_check_branch
    %16 = sbr.rel (0) target = $region13
  $region12: #{encoder_forward.1} parent=0 // pred_region
    _
  $region13: #{encoder_forward.1} parent=0 // pred_fallthru
    _
  %v18 = vld [vmem:[%s1] sm:$0xff]
  %v19 = vld [vmem:[%s1 + $0x8] sm:$0xff]
  %v20 = vld [vmem:[%s1 + $0x10] sm:$0xff]
  %v21 = vld [vmem:[%s1 + $0x18] sm:$0xff]
  %v22 = vld [vmem:[%s1 + $0x20] sm:$0xff]
  %v23 = vld [vmem:[%s1 + $0x28] sm:$0xff]
  %v24 = vld [vmem:[%s1 + $0x30] sm:$0xff]
  %v25 = vld [vmem:[%s1 + $0x38] sm:$0xff]
  %v26 = vld [vmem:[%s1 + $0x40] sm:$0xff]
  %v27 = vld [vmem:[%s1 + $0x48] sm:$0xff]
  %v28 = vld [vmem:[%s1 + $0x50] sm:$0xff]
  %v29 = vld [vmem:[%s1 + $0x58] sm:$0xff]
  %v30 = vld [vmem:[%s1 + $0x60] sm:$0xff]
  %v31 = vld [vmem:[%s1 + $0x68] sm:$0xff]
  %v32 = vld [vmem:[%s1 + $0x70] sm:$0xff]
  %v33 = vld [vmem:[%s1 + $0x78] sm:$0xff]
  %v34 = vld [vmem:[%s2] sm:$0x3]
  loop: start=0, step=1, limit=8
  $region14: #{encoder_forward.1} parent=0 // loop_pre_header
    _
  $region15: #{encoder_forward.1} parent=0 // loop_header
    %s36 = sphi 0, %s40
    %p37 = scmp.ge.s32.totalorder %s36, 8
    %v41 = vphi 0.0, %v233
    %v42 = vphi 0.0, %v227
  $region16: #{encoder_forward.1} parent=0 // loop_header_branch
    %39 = sbr.rel (%p37) target = $region20
  $region17: #{encoder_forward.1} parent=0 // loop_body
    %s43 = ssub.s32 7, %s36
    %s44 = smul.addr %s36, 4
    %s45 = scalar_lea.vmem %s0, %s44
    %v46 = vld [vmem:[%s45] sm:$0xf]
    %s47 = smul.addr %s43, 4
    %s48 = scalar_lea.vmem %s0, %s47
    %v49 = vld [vmem:[%s48] sm:$0xf]
    %v50 = vpack.c.bf16 %v41, %v41
    %52 = vrot.lane.b32.xlu0 %v50, 32
    %v53 = vpop.permute.xlu0 %52
    %v55 = vunpack.c.l.b16 %v49
    %v56 = vpack.c.b16 %v55, %v55
    %57 = vrot.lane.b32.xlu0 %v56, 64
    %v58 = vpop.permute.xlu0 %57
    %59 = vrot.lane.b32.xlu0 %v50, 64
    %v60 = vpop.permute.xlu0 %59
    %vm61 = vcmask 261120
    %v64 = vsel %vm61, %v46, %v53
    %vm65 = vcmask 523264
    %v67 = vsel %vm65, %v64, %v58
    %vm68 = vcmask 785408
    %v70 = vsel %vm68, %v67, %v60
    %v73 = vlaneseq
    %v74 = vshrl.u32 %v73, 7
    %v75 = vsub.s32 0, %v74
    %v76 = vrot.slane %v34, %v75
    %v77 = vlaneseq
    %v78 = vshrl.u32 %v77, 7
    %v79 = vsub.s32 1, %v78
    %v80 = vrot.slane %v34, %v79
    %v99 = vunpack.c.l.b16 %v18
    %v100 = vunpack.c.h.b16 %v18
    %v101 = vunpack.c.l.b16 %v19
    %v102 = vunpack.c.h.b16 %v19
    %v103 = vunpack.c.l.b16 %v20
    %v104 = vunpack.c.h.b16 %v20
    %v105 = vunpack.c.l.b16 %v21
    %v106 = vunpack.c.h.b16 %v21
    %v107 = vunpack.c.l.b16 %v22
    %v108 = vunpack.c.h.b16 %v22
    %v109 = vunpack.c.l.b16 %v23
    %v110 = vunpack.c.h.b16 %v23
    %v111 = vunpack.c.l.b16 %v24
    %v112 = vunpack.c.h.b16 %v24
    %v113 = vunpack.c.l.b16 %v25
    %v114 = vunpack.c.h.b16 %v25
    %v115 = vunpack.c.l.b16 %v26
    %v116 = vunpack.c.h.b16 %v26
    %v117 = vunpack.c.l.b16 %v27
    %v118 = vunpack.c.h.b16 %v27
    %v119 = vunpack.c.l.b16 %v28
    %v120 = vunpack.c.h.b16 %v28
    %v121 = vunpack.c.l.b16 %v29
    %v122 = vunpack.c.h.b16 %v29
    %v123 = vunpack.c.l.b16 %v30
    %v124 = vunpack.c.h.b16 %v30
    %v125 = vunpack.c.l.b16 %v31
    %v126 = vunpack.c.h.b16 %v31
    %v127 = vunpack.c.l.b16 %v32
    %v128 = vunpack.c.h.b16 %v32
    %v129 = vunpack.c.l.b16 %v33
    %v130 = vunpack.c.h.b16 %v33
    %v131 = vpack.c.b16 %v101, %v99
    %v132 = vpack.c.b16 %v102, %v100
    %v133 = vpack.c.b16 %v105, %v103
    %v134 = vpack.c.b16 %v106, %v104
    %v135 = vpack.c.b16 %v109, %v107
    %v136 = vpack.c.b16 %v110, %v108
    %v137 = vpack.c.b16 %v113, %v111
    %v138 = vpack.c.b16 %v114, %v112
    %v139 = vpack.c.b16 %v117, %v115
    %v140 = vpack.c.b16 %v118, %v116
    %v141 = vpack.c.b16 %v121, %v119
    %v142 = vpack.c.b16 %v122, %v120
    %v143 = vpack.c.b16 %v125, %v123
    %v144 = vpack.c.b16 %v126, %v124
    %v145 = vpack.c.b16 %v129, %v127
    %v146 = vpack.c.b16 %v130, %v128
    %163 = vmatprep.subr.bf16.mxu0 %v146
    %164 = vmatpush1.bf16.msra.mxu0 %v145
    %165 = vmatprep.subr.bf16.mxu0 %v144
    %166 = vmatpush1.bf16.msra.mxu0 %v143
    %167 = vmatprep.subr.bf16.mxu0 %v142
    %168 = vmatpush1.bf16.msra.mxu0 %v141
    %169 = vmatprep.subr.bf16.mxu0 %v140
    %170 = vmatpush1.bf16.msra.mxu0 %v139
    %171 = vmatprep.subr.bf16.mxu0 %v138
    %172 = vmatpush1.bf16.msra.mxu0 %v137
    %173 = vmatprep.subr.bf16.mxu0 %v136
    %174 = vmatpush1.bf16.msra.mxu0 %v135
    %175 = vmatprep.subr.bf16.mxu0 %v134
    %176 = vmatpush1.bf16.msra.mxu0 %v133
    %177 = vmatprep.subr.bf16.mxu0 %v132
    %178 = vmatpush1.bf16.msra.mxu0 %v131
    %179 = vmatprep.subr.bf16.mxu0 0
    %180 = vmatpush2.bf16.msra.mxu0 0
    %181 = vmatprep.subr.bf16.mxu0 0
    %182 = vmatpush2.bf16.msra.mxu0 0
    %183 = vmatprep.subr.bf16.mxu0 0
    %184 = vmatpush2.bf16.msra.mxu0 0
    %185 = vmatprep.subr.bf16.mxu0 0
    %186 = vmatpush2.bf16.msra.mxu0 0
    %187 = vmatprep.subr.bf16.mxu0 0
    %188 = vmatpush2.bf16.msra.mxu0 0
    %189 = vmatprep.subr.bf16.mxu0 0
    %190 = vmatpush2.bf16.msra.mxu0 0
    %191 = vmatprep.subr.bf16.mxu0 0
    %192 = vmatpush2.bf16.msra.mxu0 0
    %193 = vmatprep.subr.bf16.mxu0 0
    %194 = vmatpush2.bf16.msra.mxu0 0
    %195 = vmatprep.mubr.bf16.mxu0 0
    %196 = vmatmul.mubr.bf16.gmra.mxu0 %v70
    %v197 = vpop.f32.mrf.mxu0
    %v198 = vadd.f32 %v76, %v197
    %v199 = vpop.f32.mrf.mxu0
    %v200 = vadd.f32 %v80, %v199
    %v201 = vpop.f32.mrf.mxu0
    %v202 = vpop.f32.mrf.mxu0
    %203 = vdwg.mxu0
    %v204 = vxor.u32 %v198, 2147483648
    %v205 = vxor.u32 %v200, 2147483648
    %v206 = vmul.f32 %v204, 1.442695
    %v207 = vpow.pop %v206
    %v208 = vmul.f32 %v205, 1.442695
    %v209 = vpow.pop %v208
    %v210 = vadd.f32 %v207, 1.0
    %v211 = vadd.f32 %v209, 1.0
    %v212 = vrcp.pop %v210
    %v213 = vmul.f32 1.0, %v212
    %v214 = vrcp.pop %v211
    %v215 = vmul.f32 1.0, %v214
    %v216 = vtanh.pop %v200
    %v217 = vmul.f32 %v213, %v42
    %219 = vrot.lane.b32.xlu0 %v216, 64
    %v220 = vpop.permute.xlu0 %219
    %v222 = vmul.f32 %v213, %v220
    %224 = vrot.lane.b32.xlu0 %v222, 64
    %v225 = vpop.permute.xlu0 %224
    %v227 = vadd.f32 %v217, %v225
    %v228 = vtanh.pop %v227
    %230 = vrot.lane.b32.xlu0 %v228, 64
    %v231 = vpop.permute.xlu0 %230
    %v233 = vmul.f32 %v215, %v231
    %s234 = smul.u32 %s36, 16
    %s235 = scalar_lea.vmem %s3, %s234
    %236 = vst.msk [vmem:[%s235] sm:$0xff] %vm61, %v233
    %238 = vrot.lane.b32.xlu0 %v233, 96
    %v239 = vpop.permute.xlu0 %238
    %s241 = smul.u32 %s43, 16
    %s242 = sadd.s32 8, %s241
    %s243 = scalar_lea.vmem %s3, %s242
    %244 = vst.msk [vmem:[%s243] sm:$0xff] %vm61, %v239
  $region18: #{encoder_forward.1} parent=0 // loop_footer
    %s40 = sadd.s32 1, %s36
  $region19: #{encoder_forward.1} parent=0 // loop_footer_branch
    %35 = sbr.rel target = $region15
  $region20: #{encoder_forward.1} parent=0 // loop_exit
    _
  %vm245 = vcmask 523264
  %246 = vst.msk [vmem:[%s4] sm:$0xff] %vm245, %v41
  %248 = vrot.lane.b32.xlu0 %v42, 64
  %v249 = vpop.permute.xlu0 %248
  %251 = vst.msk [vmem:[%s5] sm:$0xff] %vm245, %v249
  // Predicated region
  $region21: #{encoder_forward.1} parent=0 // pred_check
    _
  $region22: #{encoder_forward.1} parent=0 // pred_check_branch
    %253 = sbr.rel (0) target = $region24
  $region23: #{encoder_forward.1} parent=0 // pred_region
    _
  $region24: #{encoder_forward.1} parent=0 // pred_fallthru
    _
  // Predicated region
  $region25: #{encoder_forward.1} parent=0 // pred_check
    _
  $region26: #{encoder_forward.1} parent=0 // pred_check_branch
    %255 = sbr.rel (0) target = $region28
  $region27: #{encoder_forward.1} parent=0 // pred_region
    _
  $region28: #{encoder_forward.1} parent=0 // pred_fallthru
    _
  // Predicated region
  $region29: #{encoder_forward.1} parent=0 // pred_check
    _
  $region30: #{encoder_forward.1} parent=0 // pred_check_branch
    %257 = sbr.rel (0) target = $region32
  $region31: #{encoder_forward.1} parent=0 // pred_region
    _
  $region32: #{encoder_forward.1} parent=0 // pred_fallthru
    _
  // Predicated region
  $region33: #{encoder_forward.1} parent=0 // pred_check
    _
  $region34: #{encoder_forward.1} parent=0 // pred_check_branch
    %259 = sbr.rel (0) target = $region36
  $region35: #{encoder_forward.1} parent=0 // pred_region
    _
  $region36: #{encoder_forward.1} parent=0 // pred_fallthru
    _
  // Predicated region
  $region37: #{encoder_forward.1} parent=0 // pred_check
    _
  $region38: #{encoder_forward.1} parent=0 // pred_check_branch
    %261 = sbr.rel (0) target = $region40
  $region39: #{encoder_forward.1} parent=0 // pred_region
    _
  $region40: #{encoder_forward.1} parent=0 // pred_fallthru
    _
  // Predicated region
  $region41: #{encoder_forward.1} parent=0 // pred_check
    _
  $region42: #{encoder_forward.1} parent=0 // pred_check_branch
    %263 = sbr.rel (0) target = $region44
  $region43: #{encoder_forward.1} parent=0 // pred_region
    _
  $region44: #{encoder_forward.1} parent=0 // pred_fallthru
    _

</llo_original>
